<compile_context>
chip_gen: v7x
topology: tpu7x:2x2x1
jax: 0.10.0
libtpu: 0.0.40
codegen_flags: <defaults>
</compile_context>

<pallas_src>
import functools

import jax
import jax.numpy as jnp
from jax.experimental import pallas as pl
from jax.experimental.pallas import tpu as pltpu

_LANE = 128


# ---------------------------------------------------------------------------
# Pallas kernel: 4 MXU dots on row-slices of the dense patch slab, running
# max (= MaxPool2d(2)), bias + ReLU, one lane-dense (5, TW) store.
# ---------------------------------------------------------------------------
def conv_pool_relu_kernel(p_ref, w_ref, b_ref, o_ref):
    # p_ref: (48, TW) bf16  pooling patches, rows = off*12 + (c*4 + ki*2 + kj)
    # w_ref: (5, 12)  bf16  conv weight flattened over (cin, kh, kw)
    # b_ref: (5, 1)   f32   conv bias
    # o_ref: (5, TW)  f32   output (channels, lane-dense cols)
    w = w_ref[...]                                              # (5, 12)
    k = w.shape[1]                                              # 12

    # Running max over the 4 MaxPool2d(2) window offsets; each offset is one
    # wide MXU matmul (f32 accumulation) against a 12-row slice of the slab.
    acc = jnp.dot(w, p_ref[pl.ds(0, k), :],
                  preferred_element_type=jnp.float32)           # (5, TW)
    for off in range(1, 4):
        c = jnp.dot(w, p_ref[pl.ds(off * k, k), :],
                    preferred_element_type=jnp.float32)
        acc = jnp.maximum(acc, c)

    # Per-channel bias commutes with the max (max(conv)+b == max(conv+b)),
    # then ReLU.  All post-matmul VPU work stays in f32 (v5e-safe).
    o_ref[...] = jnp.maximum(acc + b_ref[...], 0.0).astype(o_ref.dtype)


# ---------------------------------------------------------------------------
# Glue: dense, lane-dense bf16 pooling-patch slab (8 slices + 2 stacks,
# all fused by jit into one XLA program with the pallas_call).
# ---------------------------------------------------------------------------
def _pool_patches(x, ncols_pad):
    """(N, 3, H, W) f32 -> (48, ncols_pad) bf16 pooling-patch slab.

    Row index    = off*12 + c*4 + ki*2 + kj   (off = di*2 + dj, pool offset)
    Column index = n*(ph*pw) + pi*pw + pj     (batch-major, lane-dense)
    """
    n, cin, h, w = x.shape
    ph, pw = (h - 1) // 2, (w - 1) // 2
    # Stride-1 conv patches: (N, cin*4, H-1, W-1), channel index = c*4+ki*2+kj.
    p1 = jnp.stack([x[:, :, ki:ki + h - 1, kj:kj + w - 1]
                    for ki in (0, 1) for kj in (0, 1)], axis=2)
    p1 = p1.reshape(n, cin * 4, h - 1, w - 1)
    # 4 MaxPool offsets, stride-2 subsample: (4, N, cin*4, ph, pw).
    p2 = jnp.stack([p1[:, :, di:di + 2 * ph:2, dj:dj + 2 * pw:2]
                    for di in (0, 1) for dj in (0, 1)], axis=0)
    # -> (48, N*ph*pw), zero-padded to a lane-dense multiple of the tile width.
    p2 = p2.transpose(0, 2, 1, 3, 4).reshape(4 * cin * 4, n * ph * pw)
    p2 = jnp.pad(p2, ((0, 0), (0, ncols_pad - n * ph * pw)))
    return p2.astype(jnp.bfloat16)


@functools.partial(jax.jit, static_argnames=("tile_cols",))
def my_module_forward(x, w, b, *, tile_cols=16384):
    """x: (N, 3, H, W) f32, w: (5, 3, 2, 2), b: (5,) -> (N, 5*ph*pw) f32."""
    assert tile_cols % _LANE == 0
    n, cin, h, wd = x.shape
    cout, _, kh, kw = w.shape
    ph, pw = (h - 1) // 2, (wd - 1) // 2
    p = ph * pw
    k = cin * kh * kw                                   # 12
    ncols = n * p

    # Lane-dense padded column count; one big tile unless the batch is large.
    ncols_pad = -(-ncols // _LANE) * _LANE
    if ncols_pad <= tile_cols:
        tw, num_tiles = ncols_pad, 1
    else:
        tw = tile_cols
        num_tiles = -(-ncols // tw)
        ncols_pad = num_tiles * tw

    patches = _pool_patches(x.astype(jnp.float32), ncols_pad)  # (48, ncols_pad) bf16
    w2 = w.reshape(cout, k).astype(jnp.bfloat16)
    b2 = b.reshape(cout, 1).astype(jnp.float32)

    out = pl.pallas_call(
        conv_pool_relu_kernel,
        out_shape=jax.ShapeDtypeStruct((cout, ncols_pad), jnp.float32),
        grid=(num_tiles,),
        in_specs=[
            # NOTE: if profiling on v5e shows exposed patch DMA, add
            # pipeline_mode=pl.Buffered(3) here; default 2-deep is enough
            # on v6e/v7x at this tile size.
            pl.BlockSpec((4 * k, tw), lambda i: (0, i)),
            pl.BlockSpec((cout, k), lambda i: (0, 0)),
            pl.BlockSpec((cout, 1), lambda i: (0, 0)),
        ],
        out_specs=pl.BlockSpec((cout, tw), lambda i: (0, i)),
        compiler_params=pltpu.CompilerParams(
            dimension_semantics=("parallel",)),
    )(patches, w2, b2)

    # Drop padding, transpose to torch Flatten order (N, C, ph, pw) -> (N, C*ph*pw).
    out = out[:, :ncols].reshape(cout, n, p)
    return out.transpose(1, 0, 2).reshape(n, cout * p)


# ---------------------------------------------------------------------------
# Pure-JAX reference (correctness check only)
# ---------------------------------------------------------------------------
def reference_forward(x, w, b):
    conv = jax.lax.conv_general_dilated(
        x, w, window_strides=(1, 1), padding="VALID",
        dimension_numbers=("NCHW", "OIHW", "NCHW"),
        precision=jax.lax.Precision.HIGHEST)
    conv = conv + b.reshape(1, -1, 1, 1)
    pooled = jax.lax.reduce_window(
        conv, -jnp.inf, jax.lax.max,
        window_dimensions=(1, 1, 2, 2), window_strides=(1, 1, 2, 2),
        padding="VALID")
    return jnp.maximum(pooled, 0.0).reshape(x.shape[0], -1)


if __name__ == "__main__":
    key = jax.random.PRNGKey(0)
    kx, kw, kb, kx2 = jax.random.split(key, 4)

    # Deterministic params mimicking PyTorch Conv2d default init
    # (uniform in +-1/sqrt(fan_in), fan_in = 3*2*2 = 12).
    fan_in = 3 * 2 * 2
    bound = 1.0 / jnp.sqrt(jnp.float32(fan_in))
    w = jax.random.uniform(kw, (5, 3, 2, 2), jnp.float32, -bound, bound)
    b = jax.random.uniform(kb, (5,), jnp.float32, -bound, bound)

    # Small input consistent with Conv2d(3, 5, 2): batch=2, C=3, H=W=16.
    x = jax.random.normal(kx, (2, 3, 16, 16), jnp.float32)
    y = jax.block_until_ready(my_module_forward(x, w, b))
    assert y.shape == (2, 245), y.shape

    # Strict check vs a bf16-rounded-input reference (kernel feeds bf16 to the
    # MXU with f32 accumulation), loose check vs the full-f32 reference.
    x_bf = x.astype(jnp.bfloat16).astype(jnp.float32)
    w_bf = w.astype(jnp.bfloat16).astype(jnp.float32)
    y_ref_bf = reference_forward(x_bf, w_bf, b)
    y_ref_f32 = reference_forward(x, w, b)
    assert jnp.allclose(y, y_ref_bf, atol=2e-3, rtol=2e-3), "mismatch vs bf16 ref"
    assert jnp.allclose(y, y_ref_f32, atol=8e-2, rtol=8e-2), "mismatch vs f32 ref"

    # Larger batch with a small tile to exercise the multi-tile (parallel grid) path.
    x2 = jax.random.normal(kx2, (48, 3, 16, 16), jnp.float32)
    y2 = jax.block_until_ready(my_module_forward(x2, w, b, tile_cols=512))
    assert y2.shape == (48, 245), y2.shape
    y2_ref_bf = reference_forward(
        x2.astype(jnp.bfloat16).astype(jnp.float32), w_bf, b)
    assert jnp.allclose(y2, y2_ref_bf, atol=2e-3, rtol=2e-3), "mismatch (multi-tile)"

    print("KERNEL_OK")
</pallas_src>

<mosaic_0001>
module attributes {stable_mosaic.version = 11 : i64} {
  func.func @conv_pool_relu_kernel(%arg0: i32, %arg1: memref<48x128xbf16, #tpu.memory_space<vmem>>, %arg2: memref<5x12xbf16, #tpu.memory_space<vmem>>, %arg3: memref<5x1xf32, #tpu.memory_space<vmem>>, %arg4: memref<5x128xf32, #tpu.memory_space<vmem>>) attributes {dimension_semantics = [#tpu.dimension_semantics<parallel>], iteration_bounds = array<i64: 1>, scalar_prefetch = 0 : i64, scratch_operands = 0 : i64, tpu.core_type = #tpu.core_type<tc>, window_params = [{transform_indices = @transform_0, window_bounds = array<i64: 48, 128>}, {pipeline_mode = #tpu.pipeline_mode<synchronous>, transform_indices = @transform_1, window_bounds = array<i64: 5, 12>}, {pipeline_mode = #tpu.pipeline_mode<synchronous>, transform_indices = @transform_2, window_bounds = array<i64: 5, 1>}, {transform_indices = @transform_3, window_bounds = array<i64: 5, 128>}]} {
    %c0 = arith.constant 0 : index
    %c0_0 = arith.constant 0 : index
    %0 = vector.load %arg2[%c0, %c0_0] : memref<5x12xbf16, #tpu.memory_space<vmem>>, vector<5x12xbf16>
    %c0_1 = arith.constant 0 : index
    %c0_2 = arith.constant 0 : index
    %1 = vector.load %arg1[%c0_1, %c0_2] : memref<48x128xbf16, #tpu.memory_space<vmem>>, vector<12x128xbf16>
    %cst = arith.constant dense<0.000000e+00> : vector<5x128xf32>
    %2 = tpu.matmul %0, %1, %cst {dimension_numbers = #tpu.dot_dimension_numbers<[1], [0], [0], [1], [0, 0, 1, 1], [], []>} : vector<5x12xbf16>, vector<12x128xbf16>, vector<5x128xf32> -> vector<5x128xf32>
    %c12 = arith.constant 12 : index
    %c0_3 = arith.constant 0 : index
    %3 = vector.load %arg1[%c12, %c0_3] : memref<48x128xbf16, #tpu.memory_space<vmem>>, vector<12x128xbf16>
    %cst_4 = arith.constant dense<0.000000e+00> : vector<5x128xf32>
    %4 = tpu.matmul %0, %3, %cst_4 {dimension_numbers = #tpu.dot_dimension_numbers<[1], [0], [0], [1], [0, 0, 1, 1], [], []>} : vector<5x12xbf16>, vector<12x128xbf16>, vector<5x128xf32> -> vector<5x128xf32>
    %5 = arith.maximumf %2, %4 : vector<5x128xf32>
    %c24 = arith.constant 24 : index
    %c0_5 = arith.constant 0 : index
    %6 = vector.load %arg1[%c24, %c0_5] : memref<48x128xbf16, #tpu.memory_space<vmem>>, vector<12x128xbf16>
    %cst_6 = arith.constant dense<0.000000e+00> : vector<5x128xf32>
    %7 = tpu.matmul %0, %6, %cst_6 {dimension_numbers = #tpu.dot_dimension_numbers<[1], [0], [0], [1], [0, 0, 1, 1], [], []>} : vector<5x12xbf16>, vector<12x128xbf16>, vector<5x128xf32> -> vector<5x128xf32>
    %8 = arith.maximumf %5, %7 : vector<5x128xf32>
    %c36 = arith.constant 36 : index
    %c0_7 = arith.constant 0 : index
    %9 = vector.load %arg1[%c36, %c0_7] : memref<48x128xbf16, #tpu.memory_space<vmem>>, vector<12x128xbf16>
    %cst_8 = arith.constant dense<0.000000e+00> : vector<5x128xf32>
    %10 = tpu.matmul %0, %9, %cst_8 {dimension_numbers = #tpu.dot_dimension_numbers<[1], [0], [0], [1], [0, 0, 1, 1], [], []>} : vector<5x12xbf16>, vector<12x128xbf16>, vector<5x128xf32> -> vector<5x128xf32>
    %11 = arith.maximumf %8, %10 : vector<5x128xf32>
    %c0_9 = arith.constant 0 : index
    %c0_10 = arith.constant 0 : index
    %12 = vector.load %arg3[%c0_9, %c0_10] : memref<5x1xf32, #tpu.memory_space<vmem>>, vector<5x1xf32>
    %13 = vector.broadcast %12 : vector<5x1xf32> to vector<5x128xf32>
    %14 = arith.addf %11, %13 : vector<5x128xf32>
    %cst_11 = arith.constant 0.000000e+00 : f32
    %15 = vector.broadcast %cst_11 : f32 to vector<5x128xf32>
    %16 = arith.maximumf %14, %15 : vector<5x128xf32>
    %c0_12 = arith.constant 0 : index
    %c0_13 = arith.constant 0 : index
    %17 = vector.load %arg4[%c0_12, %c0_13] : memref<5x128xf32, #tpu.memory_space<vmem>>, vector<5x128xf32>
    tpu.vector_store %arg4[%c0_12, %c0_13], %16 {strides = array<i32>} : memref<5x128xf32, #tpu.memory_space<vmem>>, vector<5x128xf32>,
    return
  }
  func.func @transform_0(%arg0: i32) -> (i32, i32) {
    %c0_i32 = arith.constant 0 : i32
    %c0_i32_0 = arith.constant 0 : i32
    return %c0_i32, %arg0 : i32, i32
  }
  func.func @transform_1(%arg0: i32) -> (i32, i32) {
    %c0_i32 = arith.constant 0 : i32
    %c0_i32_0 = arith.constant 0 : i32
    %c0_i32_1 = arith.constant 0 : i32
    return %c0_i32, %c0_i32_0 : i32, i32
  }
  func.func @transform_2(%arg0: i32) -> (i32, i32) {
    %c0_i32 = arith.constant 0 : i32
    %c0_i32_0 = arith.constant 0 : i32
    %c0_i32_1 = arith.constant 0 : i32
    return %c0_i32, %c0_i32_0 : i32, i32
  }
  func.func @transform_3(%arg0: i32) -> (i32, i32) {
    %c0_i32 = arith.constant 0 : i32
    %c0_i32_0 = arith.constant 0 : i32
    return %c0_i32, %arg0 : i32, i32
  }
}

</mosaic_0001>

<llo_original>
// kernel: my_module_forward.1
$region0: #{my_module_forward.1}
  #allocation0 [shape = 'u32[]', space=smem, size = 0x4, offset = 0x4, fixed_abs, tag = 'smem constant byte address 0x4 - core index']
  #allocation1 [shape = 'u32[144,128]{1,0:T(1,128)}', space=vmem, size = 0x12000, scoped, tag = 'internal scratch']
  %s0 = inlined_call_operand.vmem [shape: bf16[48,128], index: 0, kind: input, shape index: {}]
  %s1 = inlined_call_operand.vmem [shape: bf16[5,12], index: 1, kind: input, shape index: {}]
  %s2 = inlined_call_operand.vmem [shape: f32[5,1], index: 2, kind: input, shape index: {}]
  %s3 = inlined_call_operand.vmem [shape: f32[5,128], index: 3, kind: output, shape index: {}]
  %s4 = sld [smem:[#allocation0]]
  $region22: #{my_module_forward.1} parent=0
    _
  %s6 = ssub.s32 1, %s4
  %s7 = scalar_select 0, %s6, %s4
  // Predicated region
  $region2: #{my_module_forward.1} parent=0 // pred_check
    _
  $region3: #{my_module_forward.1} parent=0 // pred_check_branch
    %9 = sbr.rel (0) target = $region5
  $region4: #{my_module_forward.1} parent=0 // pred_region
    _
  $region5: #{my_module_forward.1} parent=0 // pred_fallthru
    _
  // Predicated region
  $region6: #{my_module_forward.1} parent=0 // pred_check
    _
  $region7: #{my_module_forward.1} parent=0 // pred_check_branch
    %11 = sbr.rel (0) target = $region9
  $region8: #{my_module_forward.1} parent=0 // pred_region
    _
  $region9: #{my_module_forward.1} parent=0 // pred_fallthru
    _
  // Predicated region
  $region10: #{my_module_forward.1} parent=0 // pred_check
    _
  $region11: #{my_module_forward.1} parent=0 // pred_check_branch
    %13 = sbr.rel (0) target = $region13
  $region12: #{my_module_forward.1} parent=0 // pred_region
    _
  $region13: #{my_module_forward.1} parent=0 // pred_fallthru
    _
  %v15 = vld [vmem:[%s1] sm:$0x7]
  %v16 = vld [vmem:[%s0] sm:$0xf]
  %v17 = vld [vmem:[%s0 + $0x4] sm:$0x3]
  %v20 = vunpack.c.l.b16 %v16
  %v21 = vunpack.c.l.b16 %v17
  %v22 = vpack.c.b16 %v21, %v20
  %vm23 = vcmask 97280
  %v25 = vsel %vm23, %v15, 0
  %vm27 = vcmask 1045504
  %v29 = vsel %vm27, %v22, 0
  %31 = vmatprep.subr.bf16.mxu0 0
  %32 = vmatpush1.bf16.msra.mxu0 %v29
  %33 = vmatprep.subr.bf16.mxu0 0
  %34 = vmatpush1.bf16.msra.mxu0 0
  %35 = vmatprep.subr.bf16.mxu0 0
  %36 = vmatpush1.bf16.msra.mxu0 0
  %37 = vmatprep.subr.bf16.mxu0 0
  %38 = vmatpush1.bf16.msra.mxu0 0
  %39 = vmatprep.subr.bf16.mxu0 0
  %40 = vmatpush1.bf16.msra.mxu0 0
  %41 = vmatprep.subr.bf16.mxu0 0
  %42 = vmatpush1.bf16.msra.mxu0 0
  %43 = vmatprep.subr.bf16.mxu0 0
  %44 = vmatpush1.bf16.msra.mxu0 0
  %45 = vmatprep.subr.bf16.mxu0 0
  %46 = vmatpush1.bf16.msra.mxu0 0
  %47 = vmatprep.subr.bf16.mxu0 0
  %48 = vmatpush1.bf16.msra.mxu0 0
  %49 = vmatprep.subr.bf16.mxu0 0
  %50 = vmatpush1.bf16.msra.mxu0 0
  %51 = vmatprep.subr.bf16.mxu0 0
  %52 = vmatpush1.bf16.msra.mxu0 0
  %53 = vmatprep.subr.bf16.mxu0 0
  %54 = vmatpush1.bf16.msra.mxu0 0
  %55 = vmatprep.subr.bf16.mxu0 0
  %56 = vmatpush1.bf16.msra.mxu0 0
  %57 = vmatprep.subr.bf16.mxu0 0
  %58 = vmatpush1.bf16.msra.mxu0 0
  %59 = vmatprep.subr.bf16.mxu0 0
  %60 = vmatpush1.bf16.msra.mxu0 0
  %61 = vmatprep.subr.bf16.mxu0 0
  %62 = vmatpush1.bf16.msra.mxu0 0
  %63 = vmatprep.mubr.bf16.mxu0 0
  %64 = vmatmul.mubr.bf16.gmra.mrb[0].mxu0 %v25
  %v65 = vpop.f32.mrb[0].mxu0
  %v66 = vadd.f32 0.0, %v65
  %v67 = vpop.f32.mrb[0].mxu0
  %v68 = vpop.f32.mrb[0].mxu0
  %v69 = vpop.f32.mrb[0].mxu0
  %70 = vdwg.mxu0
  %v71 = vld [vmem:[%s0 + $0x4] sm:$0xc]
  %v72 = vld [vmem:[%s0 + $0x8] sm:$0xf]
  %v75 = vunpack.c.l.b16 %v71
  %v76 = vunpack.c.l.b16 %v72
  %v77 = vpack.c.b16 %v76, %v75
  %v78 = vrot.slane %v77, 2
  %v80 = vsel %vm27, %v78, 0
  %82 = vmatprep.subr.bf16.mxu0 0
  %83 = vmatpush1.bf16.msra.mxu0 %v80
  %84 = vmatprep.subr.bf16.mxu0 0
  %85 = vmatpush1.bf16.msra.mxu0 0
  %86 = vmatprep.subr.bf16.mxu0 0
  %87 = vmatpush1.bf16.msra.mxu0 0
  %88 = vmatprep.subr.bf16.mxu0 0
  %89 = vmatpush1.bf16.msra.mxu0 0
  %90 = vmatprep.subr.bf16.mxu0 0
  %91 = vmatpush1.bf16.msra.mxu0 0
  %92 = vmatprep.subr.bf16.mxu0 0
  %93 = vmatpush1.bf16.msra.mxu0 0
  %94 = vmatprep.subr.bf16.mxu0 0
  %95 = vmatpush1.bf16.msra.mxu0 0
  %96 = vmatprep.subr.bf16.mxu0 0
  %97 = vmatpush1.bf16.msra.mxu0 0
  %98 = vmatprep.subr.bf16.mxu0 0
  %99 = vmatpush1.bf16.msra.mxu0 0
  %100 = vmatprep.subr.bf16.mxu0 0
  %101 = vmatpush1.bf16.msra.mxu0 0
  %102 = vmatprep.subr.bf16.mxu0 0
  %103 = vmatpush1.bf16.msra.mxu0 0
  %104 = vmatprep.subr.bf16.mxu0 0
  %105 = vmatpush1.bf16.msra.mxu0 0
  %106 = vmatprep.subr.bf16.mxu0 0
  %107 = vmatpush1.bf16.msra.mxu0 0
  %108 = vmatprep.subr.bf16.mxu0 0
  %109 = vmatpush1.bf16.msra.mxu0 0
  %110 = vmatprep.subr.bf16.mxu0 0
  %111 = vmatpush1.bf16.msra.mxu0 0
  %112 = vmatprep.subr.bf16.mxu0 0
  %113 = vmatpush1.bf16.msra.mxu0 0
  %114 = vmatprep.mubr.bf16.mxu0 0
  %115 = vmatmul.mubr.bf16.gmra.mrb[0].mxu0 %v25
  %v116 = vpop.f32.mrb[0].mxu0
  %v117 = vadd.f32 0.0, %v116
  %v118 = vpop.f32.mrb[0].mxu0
  %v119 = vpop.f32.mrb[0].mxu0
  %v120 = vpop.f32.mrb[0].mxu0
  %121 = vdwg.mxu0
  %v122 = vmax.f32 %v66, %v117
  %v123 = vld [vmem:[%s0 + $0xc] sm:$0xf]
  %v124 = vld [vmem:[%s0 + $0x10] sm:$0x3]
  %v127 = vunpack.c.l.b16 %v123
  %v128 = vunpack.c.l.b16 %v124
  %v129 = vpack.c.b16 %v128, %v127
  %v131 = vsel %vm27, %v129, 0
  %133 = vmatprep.subr.bf16.mxu0 0
  %134 = vmatpush1.bf16.msra.mxu0 %v131
  %135 = vmatprep.subr.bf16.mxu0 0
  %136 = vmatpush1.bf16.msra.mxu0 0
  %137 = vmatprep.subr.bf16.mxu0 0
  %138 = vmatpush1.bf16.msra.mxu0 0
  %139 = vmatprep.subr.bf16.mxu0 0
  %140 = vmatpush1.bf16.msra.mxu0 0
  %141 = vmatprep.subr.bf16.mxu0 0
  %142 = vmatpush1.bf16.msra.mxu0 0
  %143 = vmatprep.subr.bf16.mxu0 0
  %144 = vmatpush1.bf16.msra.mxu0 0
  %145 = vmatprep.subr.bf16.mxu0 0
  %146 = vmatpush1.bf16.msra.mxu0 0
  %147 = vmatprep.subr.bf16.mxu0 0
  %148 = vmatpush1.bf16.msra.mxu0 0
  %149 = vmatprep.subr.bf16.mxu0 0
  %150 = vmatpush1.bf16.msra.mxu0 0
  %151 = vmatprep.subr.bf16.mxu0 0
  %152 = vmatpush1.bf16.msra.mxu0 0
  %153 = vmatprep.subr.bf16.mxu0 0
  %154 = vmatpush1.bf16.msra.mxu0 0
  %155 = vmatprep.subr.bf16.mxu0 0
  %156 = vmatpush1.bf16.msra.mxu0 0
  %157 = vmatprep.subr.bf16.mxu0 0
  %158 = vmatpush1.bf16.msra.mxu0 0
  %159 = vmatprep.subr.bf16.mxu0 0
  %160 = vmatpush1.bf16.msra.mxu0 0
  %161 = vmatprep.subr.bf16.mxu0 0
  %162 = vmatpush1.bf16.msra.mxu0 0
  %163 = vmatprep.subr.bf16.mxu0 0
  %164 = vmatpush1.bf16.msra.mxu0 0
  %165 = vmatprep.mubr.bf16.mxu0 0
  %166 = vmatmul.mubr.bf16.gmra.mrb[0].mxu0 %v25
  %v167 = vpop.f32.mrb[0].mxu0
  %v168 = vadd.f32 0.0, %v167
  %v169 = vpop.f32.mrb[0].mxu0
  %v170 = vpop.f32.mrb[0].mxu0
  %v171 = vpop.f32.mrb[0].mxu0
  %172 = vdwg.mxu0
  %v173 = vmax.f32 %v122, %v168
  %v174 = vld [vmem:[%s0 + $0x10] sm:$0xc]
  %v175 = vld [vmem:[%s0 + $0x14] sm:$0xf]
  %v178 = vunpack.c.l.b16 %v174
  %v179 = vunpack.c.l.b16 %v175
  %v180 = vpack.c.b16 %v179, %v178
  %v181 = vrot.slane %v180, 2
  %v183 = vsel %vm27, %v181, 0
  %185 = vmatprep.subr.bf16.mxu0 0
  %186 = vmatpush1.bf16.msra.mxu0 %v183
  %187 = vmatprep.subr.bf16.mxu0 0
  %188 = vmatpush1.bf16.msra.mxu0 0
  %189 = vmatprep.subr.bf16.mxu0 0
  %190 = vmatpush1.bf16.msra.mxu0 0
  %191 = vmatprep.subr.bf16.mxu0 0
  %192 = vmatpush1.bf16.msra.mxu0 0
  %193 = vmatprep.subr.bf16.mxu0 0
  %194 = vmatpush1.bf16.msra.mxu0 0
  %195 = vmatprep.subr.bf16.mxu0 0
  %196 = vmatpush1.bf16.msra.mxu0 0
  %197 = vmatprep.subr.bf16.mxu0 0
  %198 = vmatpush1.bf16.msra.mxu0 0
  %199 = vmatprep.subr.bf16.mxu0 0
  %200 = vmatpush1.bf16.msra.mxu0 0
  %201 = vmatprep.subr.bf16.mxu0 0
  %202 = vmatpush1.bf16.msra.mxu0 0
  %203 = vmatprep.subr.bf16.mxu0 0
  %204 = vmatpush1.bf16.msra.mxu0 0
  %205 = vmatprep.subr.bf16.mxu0 0
  %206 = vmatpush1.bf16.msra.mxu0 0
  %207 = vmatprep.subr.bf16.mxu0 0
  %208 = vmatpush1.bf16.msra.mxu0 0
  %209 = vmatprep.subr.bf16.mxu0 0
  %210 = vmatpush1.bf16.msra.mxu0 0
  %211 = vmatprep.subr.bf16.mxu0 0
  %212 = vmatpush1.bf16.msra.mxu0 0
  %213 = vmatprep.subr.bf16.mxu0 0
  %214 = vmatpush1.bf16.msra.mxu0 0
  %215 = vmatprep.subr.bf16.mxu0 0
  %216 = vmatpush1.bf16.msra.mxu0 0
  %217 = vmatprep.mubr.bf16.mxu0 0
  %218 = vmatmul.mubr.bf16.gmra.mrb[0].mxu0 %v25
  %v219 = vpop.f32.mrb[0].mxu0
  %v220 = vadd.f32 0.0, %v219
  %v221 = vpop.f32.mrb[0].mxu0
  %v222 = vpop.f32.mrb[0].mxu0
  %v223 = vpop.f32.mrb[0].mxu0
  %224 = vdwg.mxu0
  %v225 = vmax.f32 %v173, %v220
  %v226 = vld [vmem:[%s2] sm:$0x1f]
  %228 = vset.pattern.permute.xlu0 0
  %229 = vperm.xlu0 %228, %v226
  %v230 = vpop.permute.xlu0 %229
  %v232 = vadd.f32 %v225, %v230
  %v233 = vmax.f32 %v232, 0.0
  %234 = vst [vmem:[%s3] sm:$0x1f] %v233
  // Predicated region
  $region14: #{my_module_forward.1} parent=0 // pred_check
    _
  $region15: #{my_module_forward.1} parent=0 // pred_check_branch
    %236 = sbr.rel (0) target = $region17
  $region16: #{my_module_forward.1} parent=0 // pred_region
    _
  $region17: #{my_module_forward.1} parent=0 // pred_fallthru
    _
  // Predicated region
  $region18: #{my_module_forward.1} parent=0 // pred_check
    _
  $region19: #{my_module_forward.1} parent=0 // pred_check_branch
    %238 = sbr.rel (0) target = $region21
  $region20: #{my_module_forward.1} parent=0 // pred_region
    _
  $region21: #{my_module_forward.1} parent=0 // pred_fallthru
    _

</llo_original>
